<compile_context>
chip_gen: v5e
topology: v5e:2x2
jax: 0.10.0
libtpu: 0.0.40
codegen_flags: <defaults>
</compile_context>

<pallas_src>
import functools

import jax
import jax.numpy as jnp
from jax.experimental import pallas as pl
from jax.experimental.pallas import tpu as pltpu


# ------------------------------ tiling helpers ------------------------------ #

def _pick_batch_chunk(N, L, row_bytes, budget=8 << 20, min_grid=2):
    """Largest divisor NB of N whose (NB*L)-row block fits the VMEM byte budget,
    keeps the sublane dim 8-aligned, and (when possible) leaves >= min_grid
    parallel grid steps so both v7x TensorCores get work."""
    best = None
    for nb in range(1, N + 1):
        if N % nb:
            continue
        if (nb * L) % 8 != 0 and nb != N:     # (8,128) sublane alignment
            continue
        if nb * L * row_bytes > budget:
            continue
        if N >= min_grid and N // nb < min_grid:
            continue
        best = nb
    if best is None:
        # TODO(synk): chunk along L with a (K-1)*dil halo for very long rows.
        best = N if (L % 8 != 0) else 1
    return best


# --------------------------- in-kernel building blocks ----------------------- #

def _row_mod(R, L):
    """Per-row position within its batch (None when the block is one batch)."""
    if R == L:
        return None
    return jax.lax.broadcasted_iota(jnp.int32, (R, 1), 0) % L


def _shift_rows(xf, s, l_mod):
    """Causal shift by s rows: row r gets row r-s of the same batch, else 0."""
    R, C = xf.shape
    shifted = jnp.concatenate(
        [jnp.zeros((s, C), xf.dtype), xf[:R - s, :]], axis=0)
    if l_mod is not None:                      # mask rows that crossed a batch
        shifted = jnp.where(l_mod >= s, shifted, 0.0)
    return shifted


def _causal_conv(xf, w_ref, dil, l_mod):
    """Causal dilated conv as K accumulated matmuls (no im2col buffer).

    xf:    (R, Cin) rows (R = NB*L), w_ref: (K, Cin, Cout).  Returns (R, Cout) f32.
    """
    K = w_ref.shape[0]
    acc = None
    for t in range(K):                         # static unroll over taps
        s = (K - 1 - t) * dil
        xt = xf if s == 0 else _shift_rows(xf, s, l_mod)
        p = jnp.dot(xt, w_ref[t], preferred_element_type=jnp.float32)
        acc = p if acc is None else acc + p
    return acc


def _bn_partial(y):
    """Per-block BN statistics: row0 = mean, row1 = sum((y-mean)^2)."""
    mu = jnp.mean(y, axis=0, keepdims=True)
    m2 = jnp.sum(jnp.square(y - mu), axis=0, keepdims=True)
    return jnp.concatenate([mu, m2], axis=0)   # (2, C)


def _block1_forward(xf, w1_ref, s1_ref, b1_ref, wd0_ref, bd0_ref, dil1, l_mod):
    """out0 = relu(relu(BN1(conv1(x))) + downsample0(x)), all in VMEM (f32)."""
    y1 = _causal_conv(xf, w1_ref, dil1, l_mod)
    x0 = jnp.maximum(y1 * s1_ref[...] + b1_ref[...], 0.0)
    if wd0_ref is None:                        # identity downsample: pass-through
        r0 = xf.astype(jnp.float32)
    else:
        r0 = jnp.dot(xf, wd0_ref[...],
                     preferred_element_type=jnp.float32) + bd0_ref[...]
    return jnp.maximum(x0 + r0, 0.0)


# ----------------------------- Pallas kernel bodies -------------------------- #

def _k_stats1(x_ref, w1_ref, o_ref, *, L, dil):
    xf = x_ref[...]
    l_mod = _row_mod(xf.shape[0], L)
    y1 = _causal_conv(xf, w1_ref, dil, l_mod)
    o_ref[0] = _bn_partial(y1)


def _k_stats2(x_ref, w1_ref, s1_ref, b1_ref, *rest, L, dil1, dil2, has_ds0, cdt):
    if has_ds0:
        wd0_ref, bd0_ref, w2_ref, o_ref = rest
    else:
        wd0_ref = bd0_ref = None
        w2_ref, o_ref = rest
    xf = x_ref[...]
    l_mod = _row_mod(xf.shape[0], L)
    out0 = _block1_forward(xf, w1_ref, s1_ref, b1_ref, wd0_ref, bd0_ref,
                           dil1, l_mod)
    y2 = _causal_conv(out0.astype(cdt), w2_ref, dil2, l_mod)
    o_ref[0] = _bn_partial(y2)


def _k_out(x_ref, w1_ref, s1_ref, b1_ref, *rest,
           L, dil1, dil2, has_ds0, has_ds1, cdt):
    i = 0
    if has_ds0:
        wd0_ref, bd0_ref = rest[0], rest[1]
        i = 2
    else:
        wd0_ref = bd0_ref = None
    w2_ref, s2_ref, b2_ref = rest[i], rest[i + 1], rest[i + 2]
    i += 3
    if has_ds1:
        wd1_ref, bd1_ref = rest[i], rest[i + 1]
        i += 2
    else:
        wd1_ref = bd1_ref = None
    o_ref = rest[i]

    xf = x_ref[...]
    l_mod = _row_mod(xf.shape[0], L)
    out0 = _block1_forward(xf, w1_ref, s1_ref, b1_ref, wd0_ref, bd0_ref,
                           dil1, l_mod)
    y2 = _causal_conv(out0.astype(cdt), w2_ref, dil2, l_mod)
    x1 = jnp.maximum(y2 * s2_ref[...] + b2_ref[...], 0.0)
    if wd1_ref is None:                        # identity downsample for block 2
        r1 = out0
    else:
        r1 = jnp.dot(out0.astype(cdt), wd1_ref[...],
                     preferred_element_type=jnp.float32) + bd1_ref[...]
    o_ref[...] = jnp.maximum(x1 + r1, 0.0).astype(o_ref.dtype)


# ------------------------------ finalize (tiny) ------------------------------ #

def _finalize_bn(stats, gamma, beta, rows_per_block, eps):
    """Chan/Welford combine of per-block (mean, M2) -> BN scale/shift."""
    mu_g = stats[:, 0, :]                      # (G, C)
    m2_g = stats[:, 1, :]                      # (G, C)
    mean = jnp.mean(mu_g, axis=0)              # equal block counts
    m2 = jnp.sum(m2_g, axis=0) + rows_per_block * jnp.sum(
        (mu_g - mean[None, :]) ** 2, axis=0)
    var = m2 / (stats.shape[0] * rows_per_block)   # biased, like torch BN train
    scale = gamma / jnp.sqrt(var + eps)
    shift = beta - mean * scale
    return (scale.reshape(1, -1).astype(jnp.float32),
            shift.reshape(1, -1).astype(jnp.float32))


# ------------------------------ model wrapper -------------------------------- #

def temporal_conv_net(x_ncl, params, kernel_size, eps=1e-5,
                      compute_dtype=jnp.float32, vmem_block_budget=8 << 20):
    """Input (N, C_in, L) -> output (N, tcn_layers[1], L), float32.

    compute_dtype=jnp.bfloat16 is the perf setting on v5e/v6e/v7x (activations
    and weights stored/moved in bf16, matmul accumulation + BN math in f32).
    """
    N, Cin, L = x_ncl.shape
    C0 = params["w1"].shape[-1]
    C1 = params["w2"].shape[-1]
    cdt = compute_dtype

    # (N, Cin, L) -> flat (N*L, Cin) rows with channels on the lane axis.
    # TODO(synk): fold this NCL->NLC transpose (and the inverse at the exit)
    # into the kernels as an in-block XLU transpose once verified on all gens.
    x_flat = jnp.transpose(x_ncl, (0, 2, 1)).reshape(N * L, Cin).astype(cdt)

    w1 = params["w1"].astype(cdt)                              # (K, Cin, C0)
    w2 = params["w2"].astype(cdt)                              # (K, C0,  C1)
    has_ds0 = params["wd0"] is not None
    has_ds1 = params["wd1"] is not None
    wd0 = params["wd0"].astype(cdt) if has_ds0 else None
    bd0 = params["bd0"].reshape(1, C0).astype(jnp.float32) if has_ds0 else None
    wd1 = params["wd1"].astype(cdt) if has_ds1 else None
    bd1 = params["bd1"].reshape(1, C1).astype(jnp.float32) if has_ds1 else None

    # VMEM-resident bytes per row (x double-buffered + one shifted tap +
    # y1/out0 + y2 + residual), used to derive the batch chunk from a budget.
    ib = jnp.dtype(cdt).itemsize
    row_bytes = 2 * ib * Cin + ib * max(Cin, C0) + 4 * (3 * C0 + 2 * C1)
    NB = _pick_batch_chunk(N, L, row_bytes, budget=vmem_block_budget)
    G = N // NB
    RB = NB * L

    cp = pltpu.CompilerParams(dimension_semantics=("parallel",),
                              vmem_limit_bytes=64 * 1024 * 1024)

    x_spec = pl.BlockSpec((RB, Cin), lambda g: (g, 0))

    def full(a):                                # whole (small) array every step
        zeros = (0,) * a.ndim
        return pl.BlockSpec(a.shape, lambda g: zeros)

    def stats_spec(C):
        return pl.BlockSpec((1, 2, C), lambda g: (g, 0, 0))

    # ---------------- pass A: BN1 partial statistics ---------------- #
    stats1 = pl.pallas_call(
        functools.partial(_k_stats1, L=L, dil=1),
        out_shape=jax.ShapeDtypeStruct((G, 2, C0), jnp.float32),
        grid=(G,),
        in_specs=[x_spec, full(w1)],
        out_specs=stats_spec(C0),
        compiler_params=cp,
    )(x_flat, w1)
    s1, b1 = _finalize_bn(stats1, params["gamma1"], params["beta1"], RB, eps)

    # ---------------- pass B: fused block1 + conv2 -> BN2 stats ---------------- #
    args = [x_flat, w1, s1, b1]
    specs = [x_spec, full(w1), full(s1), full(b1)]
    if has_ds0:
        args += [wd0, bd0]
        specs += [full(wd0), full(bd0)]
    args += [w2]
    specs += [full(w2)]
    stats2 = pl.pallas_call(
        functools.partial(_k_stats2, L=L, dil1=1, dil2=2,
                          has_ds0=has_ds0, cdt=cdt),
        out_shape=jax.ShapeDtypeStruct((G, 2, C1), jnp.float32),
        grid=(G,),
        in_specs=specs,
        out_specs=stats_spec(C1),
        compiler_params=cp,
    )(*args)
    s2, b2 = _finalize_bn(stats2, params["gamma2"], params["beta2"], RB, eps)

    # ---------------- pass C: fully fused forward -> output ---------------- #
    args = [x_flat, w1, s1, b1]
    specs = [x_spec, full(w1), full(s1), full(b1)]
    if has_ds0:
        args += [wd0, bd0]
        specs += [full(wd0), full(bd0)]
    args += [w2, s2, b2]
    specs += [full(w2), full(s2), full(b2)]
    if has_ds1:
        args += [wd1, bd1]
        specs += [full(wd1), full(bd1)]
    out_flat = pl.pallas_call(
        functools.partial(_k_out, L=L, dil1=1, dil2=2,
                          has_ds0=has_ds0, has_ds1=has_ds1, cdt=cdt),
        out_shape=jax.ShapeDtypeStruct((N * L, C1), jnp.float32),
        grid=(G,),
        in_specs=specs,
        out_specs=pl.BlockSpec((RB, C1), lambda g: (g, 0)),
        compiler_params=cp,
    )(*args)

    return jnp.transpose(out_flat.reshape(N, L, C1), (0, 2, 1))   # (N, C, L)


# ------------------------------- parameters --------------------------------- #

def init_params(key, input_channels, tcn_layers, kernel_size):
    c_in = input_channels
    c0 = tcn_layers[1]
    c1 = tcn_layers[1]
    ks = jax.random.split(key, 10)
    p = {
        "w1": 0.2 * jax.random.normal(ks[0], (kernel_size, c_in, c0), jnp.float32),
        "gamma1": 1.0 + 0.1 * jax.random.normal(ks[1], (c0,), jnp.float32),
        "beta1": 0.1 * jax.random.normal(ks[2], (c0,), jnp.float32),
        "w2": 0.2 * jax.random.normal(ks[3], (kernel_size, c0, c1), jnp.float32),
        "gamma2": 1.0 + 0.1 * jax.random.normal(ks[4], (c1,), jnp.float32),
        "beta2": 0.1 * jax.random.normal(ks[5], (c1,), jnp.float32),
    }
    if c_in != c0:                                   # downsample0 = Conv1d(c_in, c0, 1)
        p["wd0"] = 0.2 * jax.random.normal(ks[6], (c_in, c0), jnp.float32)
        p["bd0"] = 0.1 * jax.random.normal(ks[7], (c0,), jnp.float32)
    else:
        p["wd0"], p["bd0"] = None, None
    if tcn_layers[0] != tcn_layers[1]:               # downsample1 = Conv1d(c0, c1, 1)
        p["wd1"] = 0.2 * jax.random.normal(ks[8], (c0, c1), jnp.float32)
        p["bd1"] = 0.1 * jax.random.normal(ks[9], (c1,), jnp.float32)
    else:
        p["wd1"], p["bd1"] = None, None
    return p


# ----------------------- pure-JAX reference (NCL, like torch) ---------------- #

def reference(x_ncl, params, kernel_size, eps=1e-5):
    L = x_ncl.shape[2]

    def conv1d_chomp(x, w_kio, dilation):
        pad = (kernel_size - 1) * dilation
        w = jnp.transpose(w_kio, (2, 1, 0))                     # (Cout, Cin, K)
        y = jax.lax.conv_general_dilated(
            x, w, window_strides=(1,), padding=[(pad, pad)],
            rhs_dilation=(dilation,), dimension_numbers=("NCH", "OIH", "NCH"))
        return y[:, :, :L]                                      # Chomp1d

    def bn_train(y, gamma, beta):
        mean = jnp.mean(y, axis=(0, 2), keepdims=True)
        var = jnp.mean((y - mean) ** 2, axis=(0, 2), keepdims=True)
        return ((y - mean) / jnp.sqrt(var + eps)) * gamma[None, :, None] \
            + beta[None, :, None]

    x0 = jax.nn.relu(bn_train(conv1d_chomp(x_ncl, params["w1"], 1),
                              params["gamma1"], params["beta1"]))
    if params["wd0"] is None:
        res0 = x_ncl
    else:
        res0 = jnp.einsum("ncl,co->nol", x_ncl, params["wd0"]) \
            + params["bd0"][None, :, None]
    out0 = jax.nn.relu(x0 + res0)

    x1 = jax.nn.relu(bn_train(conv1d_chomp(out0, params["w2"], 2),
                              params["gamma2"], params["beta2"]))
    if params["wd1"] is None:
        res1 = out0
    else:
        res1 = jnp.einsum("ncl,co->nol", out0, params["wd1"]) \
            + params["bd1"][None, :, None]
    return jax.nn.relu(x1 + res1)


# ---------------------------------- main ------------------------------------- #

if __name__ == "__main__":
    KERNEL_SIZE = 3

    # Case 1: channel-changing blocks (1x1 downsample residuals).
    N, C_IN, L = 2, 4, 16
    TCN_LAYERS = [16, 32]
    key = jax.random.PRNGKey(0)
    k_x, k_p, k_x2, k_p2 = jax.random.split(key, 4)
    x = jax.random.normal(k_x, (N, C_IN, L), jnp.float32)
    params = init_params(k_p, C_IN, TCN_LAYERS, KERNEL_SIZE)

    out = jax.block_until_ready(temporal_conv_net(x, params, KERNEL_SIZE))
    ref = reference(x, params, KERNEL_SIZE)
    assert out.shape == (N, TCN_LAYERS[1], L), out.shape
    err1 = float(jnp.max(jnp.abs(out - ref)))
    assert jnp.allclose(out, ref, atol=1e-4, rtol=1e-4), f"max_err={err1}"

    # Case 2: identity downsample (residual pass-through path).
    N2, C_IN2, L2 = 2, 16, 16
    TCN_LAYERS2 = [16, 16]
    x2 = jax.random.normal(k_x2, (N2, C_IN2, L2), jnp.float32)
    params2 = init_params(k_p2, C_IN2, TCN_LAYERS2, KERNEL_SIZE)

    out2 = jax.block_until_ready(temporal_conv_net(x2, params2, KERNEL_SIZE))
    ref2 = reference(x2, params2, KERNEL_SIZE)
    assert out2.shape == (N2, TCN_LAYERS2[1], L2), out2.shape
    err2 = float(jnp.max(jnp.abs(out2 - ref2)))
    assert jnp.allclose(out2, ref2, atol=1e-4, rtol=1e-4), f"max_err={err2}"

    # bf16 compute path (the recommended perf configuration on v5e/v6e/v7x):
    # same kernels, activations/weights stored in bf16, loose tolerance.
    out_bf = jax.block_until_ready(
        temporal_conv_net(x, params, KERNEL_SIZE, compute_dtype=jnp.bfloat16))
    err_bf = float(jnp.max(jnp.abs(out_bf - ref)))
    assert jnp.allclose(out_bf, ref, atol=1e-1, rtol=1e-1), f"bf16_err={err_bf}"

    print("KERNEL_OK")
</pallas_src>

<mosaic_0001>
module attributes {stable_mosaic.version = 11 : i64} {
  func.func @_k_stats1(%arg0: i32, %arg1: memref<16x4xf32, #tpu.memory_space<vmem>>, %arg2: memref<3x4x32xf32, #tpu.memory_space<vmem>>, %arg3: memref<1x2x32xf32, #tpu.memory_space<vmem>>) attributes {dimension_semantics = [#tpu.dimension_semantics<parallel>], iteration_bounds = array<i64: 2>, scalar_prefetch = 0 : i64, scratch_operands = 0 : i64, tpu.core_type = #tpu.core_type<tc>, window_params = [{transform_indices = @transform_0, window_bounds = array<i64: 16, 4>}, {pipeline_mode = #tpu.pipeline_mode<synchronous>, transform_indices = @transform_1, window_bounds = array<i64: 3, 4, 32>}, {transform_indices = @transform_2, window_bounds = array<i64: 1, 2, 32>}]} {
    %c0 = arith.constant 0 : index
    %c0_0 = arith.constant 0 : index
    %0 = vector.load %arg1[%c0, %c0_0] : memref<16x4xf32, #tpu.memory_space<vmem>>, vector<16x4xf32>
    %cst = arith.constant 0.000000e+00 : f32
    %1 = vector.broadcast %cst : f32 to vector<2x4xf32>
    %2 = vector.extract_strided_slice %0 {offsets = [0, 0], sizes = [14, 4], strides = [1, 1]} : vector<16x4xf32> to vector<14x4xf32>
    %3 = tpu.concatenate %1, %2 in 0 : vector<2x4xf32>, vector<14x4xf32> -> vector<16x4xf32>
    %c0_1 = arith.constant 0 : index
    %c0_2 = arith.constant 0 : index
    %c0_3 = arith.constant 0 : index
    %4 = vector.load %arg2[%c0_1, %c0_2, %c0_3] : memref<3x4x32xf32, #tpu.memory_space<vmem>>, vector<1x4x32xf32>
    %5 = vector.shape_cast %4 : vector<1x4x32xf32> to vector<4x32xf32>
    %cst_4 = arith.constant dense<0.000000e+00> : vector<16x32xf32>
    %6 = tpu.matmul %3, %5, %cst_4 {dimension_numbers = #tpu.dot_dimension_numbers<[1], [0], [0], [1], [0, 0, 1, 1], [], []>} : vector<16x4xf32>, vector<4x32xf32>, vector<16x32xf32> -> vector<16x32xf32>
    %cst_5 = arith.constant 0.000000e+00 : f32
    %7 = vector.broadcast %cst_5 : f32 to vector<1x4xf32>
    %8 = vector.extract_strided_slice %0 {offsets = [0, 0], sizes = [15, 4], strides = [1, 1]} : vector<16x4xf32> to vector<15x4xf32>
    %9 = tpu.concatenate %7, %8 in 0 : vector<1x4xf32>, vector<15x4xf32> -> vector<16x4xf32>
    %c1 = arith.constant 1 : index
    %c0_6 = arith.constant 0 : index
    %c0_7 = arith.constant 0 : index
    %10 = vector.load %arg2[%c1, %c0_6, %c0_7] : memref<3x4x32xf32, #tpu.memory_space<vmem>>, vector<1x4x32xf32>
    %11 = vector.shape_cast %10 : vector<1x4x32xf32> to vector<4x32xf32>
    %cst_8 = arith.constant dense<0.000000e+00> : vector<16x32xf32>
    %12 = tpu.matmul %9, %11, %cst_8 {dimension_numbers = #tpu.dot_dimension_numbers<[1], [0], [0], [1], [0, 0, 1, 1], [], []>} : vector<16x4xf32>, vector<4x32xf32>, vector<16x32xf32> -> vector<16x32xf32>
    %13 = arith.addf %6, %12 : vector<16x32xf32>
    %c2 = arith.constant 2 : index
    %c0_9 = arith.constant 0 : index
    %c0_10 = arith.constant 0 : index
    %14 = vector.load %arg2[%c2, %c0_9, %c0_10] : memref<3x4x32xf32, #tpu.memory_space<vmem>>, vector<1x4x32xf32>
    %15 = vector.shape_cast %14 : vector<1x4x32xf32> to vector<4x32xf32>
    %cst_11 = arith.constant dense<0.000000e+00> : vector<16x32xf32>
    %16 = tpu.matmul %0, %15, %cst_11 {dimension_numbers = #tpu.dot_dimension_numbers<[1], [0], [0], [1], [0, 0, 1, 1], [], []>} : vector<16x4xf32>, vector<4x32xf32>, vector<16x32xf32> -> vector<16x32xf32>
    %17 = arith.addf %13, %16 : vector<16x32xf32>
    %cst_12 = arith.constant dense<0.000000e+00> : vector<32xf32>
    %18 = vector.multi_reduction <add>, %17, %cst_12 [0] : vector<16x32xf32> to vector<32xf32>
    %19 = vector.shape_cast %18 : vector<32xf32> to vector<1x32xf32>
    %cst_13 = arith.constant 1.600000e+01 : f32
    %20 = vector.broadcast %cst_13 : f32 to vector<1x32xf32>
    %21 = arith.divf %19, %20 : vector<1x32xf32>
    %22 = vector.broadcast %21 : vector<1x32xf32> to vector<16x32xf32>
    %23 = arith.subf %17, %22 : vector<16x32xf32>
    %24 = arith.mulf %23, %23 : vector<16x32xf32>
    %cst_14 = arith.constant dense<0.000000e+00> : vector<32xf32>
    %25 = vector.multi_reduction <add>, %24, %cst_14 [0] : vector<16x32xf32> to vector<32xf32>
    %26 = vector.shape_cast %25 : vector<32xf32> to vector<1x32xf32>
    %27 = tpu.concatenate %21, %26 in 0 : vector<1x32xf32>, vector<1x32xf32> -> vector<2x32xf32>
    %c0_15 = arith.constant 0 : index
    %c0_16 = arith.constant 0 : index
    %c0_17 = arith.constant 0 : index
    %28 = vector.load %arg3[%c0_15, %c0_16, %c0_17] : memref<1x2x32xf32, #tpu.memory_space<vmem>>, vector<1x2x32xf32>
    %29 = vector.shape_cast %28 : vector<1x2x32xf32> to vector<2x32xf32>
    %30 = vector.shape_cast %27 : vector<2x32xf32> to vector<1x2x32xf32>
    tpu.vector_store %arg3[%c0_15, %c0_16, %c0_17], %30 {strides = array<i32>} : memref<1x2x32xf32, #tpu.memory_space<vmem>>, vector<1x2x32xf32>,
    return
  }
  func.func @transform_0(%arg0: i32) -> (i32, i32) {
    %c0_i32 = arith.constant 0 : i32
    %c0_i32_0 = arith.constant 0 : i32
    return %arg0, %c0_i32 : i32, i32
  }
  func.func @transform_1(%arg0: i32) -> (i32, i32, i32) {
    %c0_i32 = arith.constant 0 : i32
    %c0_i32_0 = arith.constant 0 : i32
    %c0_i32_1 = arith.constant 0 : i32
    %c0_i32_2 = arith.constant 0 : i32
    return %c0_i32, %c0_i32_0, %c0_i32_1 : i32, i32, i32
  }
  func.func @transform_2(%arg0: i32) -> (i32, i32, i32) {
    %c0_i32 = arith.constant 0 : i32
    %c0_i32_0 = arith.constant 0 : i32
    %c0_i32_1 = arith.constant 0 : i32
    return %arg0, %c0_i32, %c0_i32_0 : i32, i32, i32
  }
}

</mosaic_0001>

<llo_original>
// kernel: tpu_custom_call.1
$region0: #{tpu_custom_call.1}
  #allocation0 [shape = 'u32[]', space=smem, size = 0x4, offset = 0x4, fixed_abs, tag = 'smem constant byte address 0x4 - core index']
  #allocation1 [shape = 'u32[72,128]{1,0:T(1,128)}', space=vmem, size = 0x9000, scoped, tag = 'internal scratch']
  %s0 = inlined_call_operand.vmem [shape: f32[32,4], index: 0, kind: input, shape index: {}]
  %s1 = inlined_call_operand.vmem [shape: f32[3,4,32], index: 1, kind: input, shape index: {}]
  %s2 = inlined_call_operand.hbm [shape: f32[2,2,32], index: 2, kind: output, shape index: {}]
  %s3 = sld [smem:[#allocation0]]
  $region41: #{tpu_custom_call.1} parent=0
    _
  %s5 = ssub.s32 1, %s3
  %s6 = scalar_select 0, %s5, %s3
  $region1: #{tpu_custom_call.1} parent=0
    #allocation2 [shape = 'u8[2048]{0}', space=vmem, size = 0x800, scoped, tag = 'output window, operand 0']
    #allocation3 [shape = 's32[2]{0}', space=sflag, size = 0x8, scoped, tag = 'scoped memory for tpu_custom_call.1']
    %7 = vsyncpa [#allocation3], 0
    %s8 = scalar_lea.sflag [#allocation3], 1
    %9 = vsyncpa %s8, 0
    loop: start=0, step=1, limit=4
    $region2: #{tpu_custom_call.1} parent=1 // loop_pre_header
      _
    $region3: #{tpu_custom_call.1} parent=1 // loop_header
      %s11 = sphi 0, %s15
      %p12 = scmp.ge.s32.totalorder %s11, 4
      %s21 = sphi 0, %s23
      %s24 = sphi 0, %s21
      %s25 = sphi 0, %s24
      %s41 = sphi 0, %s25
      %s45 = sphi 0, %s45
      %s47 = sphi 0, %s45
      %s48 = sphi 0, %s47
      %s62 = sphi 0, %s48
      %s68 = sphi 0, %s70
      %s71 = sphi 0, %s68
      %s72 = sphi 0, %s71
      %s88 = sphi 0, %s72
    $region4: #{tpu_custom_call.1} parent=1 // loop_header_branch
      %14 = sbr.rel (%p12) target = $region8
    $region5: #{tpu_custom_call.1} parent=1 // loop_body
      %s16 = ssub.s32 %s11, 1
      %s17 = ssub.s32 %s11, 2
      %s18 = sadd.s32 %s11, 1
      %s19 = ssub.s32 %s11, %s18
      %p20 = scmp.eq.s32.totalorder %s19, 0
      %s22 = sadd.s32 %s21, 1
      %s23 = scalar_select %p20, %s21, %s22
      %p26 = pneg %p20
      %p27 = scmp.eq.s32.totalorder %s11, 1
      %p28 = por %p26, %p27
      %p29 = scmp.ne.s32.totalorder %s21, %s24
      %p30 = scmp.eq.s32.totalorder %s11, 0
      %p31 = por %p29, %p30
      %p32 = scmp.ne.s32.totalorder %s21, %s24
      %p33 = scmp.eq.s32.totalorder %s16, 1
      %p34 = por %p32, %p33
      %p35 = scmp.ne.s32.totalorder %s24, %s25
      %p36 = scmp.eq.s32.totalorder %s16, 0
      %p37 = por %p35, %p36
      %p38 = scmp.ne.s32.totalorder %s24, %s25
      %p39 = scmp.eq.s32.totalorder %s17, 1
      %p40 = por %p38, %p39
      %p42 = scmp.ne.s32.totalorder %s25, %s41
      %p43 = scmp.eq.s32.totalorder %s17, 0
      %p44 = por %p42, %p43
      %s46 = sadd.s32 %s45, 1
      %p49 = scmp.eq.s32.totalorder %s11, 1
      %p50 = scmp.ne.s32.totalorder %s45, %s47
      %p51 = scmp.eq.s32.totalorder %s11, 0
      %p52 = por %p50, %p51
      %p53 = scmp.ne.s32.totalorder %s45, %s47
      %p54 = scmp.eq.s32.totalorder %s16, 1
      %p55 = por %p53, %p54
      %p56 = scmp.ne.s32.totalorder %s47, %s48
      %p57 = scmp.eq.s32.totalorder %s16, 0
      %p58 = por %p56, %p57
      %p59 = scmp.ne.s32.totalorder %s47, %s48
      %p60 = scmp.eq.s32.totalorder %s17, 1
      %p61 = por %p59, %p60
      %p63 = scmp.ne.s32.totalorder %s48, %s62
      %p64 = scmp.eq.s32.totalorder %s17, 0
      %p65 = por %p63, %p64
      %s66 = ssub.s32 %s11, %s18
      %p67 = scmp.eq.s32.totalorder %s66, 0
      %s69 = sadd.s32 %s68, 1
      %s70 = scalar_select %p67, %s68, %s69
      %p73 = pneg %p67
      %p74 = scmp.eq.s32.totalorder %s11, 1
      %p75 = por %p73, %p74
      %p76 = scmp.ne.s32.totalorder %s68, %s71
      %p77 = scmp.eq.s32.totalorder %s11, 0
      %p78 = por %p76, %p77
      %p79 = scmp.ne.s32.totalorder %s68, %s71
      %p80 = scmp.eq.s32.totalorder %s16, 1
      %p81 = por %p79, %p80
      %p82 = scmp.ne.s32.totalorder %s71, %s72
      %p83 = scmp.eq.s32.totalorder %s16, 0
      %p84 = por %p82, %p83
      %p85 = scmp.ne.s32.totalorder %s71, %s72
      %p86 = scmp.eq.s32.totalorder %s17, 1
      %p87 = por %p85, %p86
      %p89 = scmp.ne.s32.totalorder %s72, %s88
      %p90 = scmp.eq.s32.totalorder %s17, 0
      %p91 = por %p89, %p90
      %p92 = scmp.le.s32.totalorder 1, %s11
      %p93 = scmp.lt.s32.totalorder %s11, 3
      %p94 = pnand %p92, %p93
      %p95 = pneg %p94
      // Predicated region
      $region9: #{tpu_custom_call.1} parent=5 // pred_check
        _
      $region10: #{tpu_custom_call.1} parent=5 // pred_check_branch
        %97 = sbr.rel (%p94) target = $region12
      $region11: #{tpu_custom_call.1} parent=5 // pred_region
        %s98 = ssub.s32 %s11, 1
        // Predicated region
        $region13: #{tpu_custom_call.1} parent=11 // pred_check
          %p99 = pneg %p58
        $region14: #{tpu_custom_call.1} parent=11 // pred_check_branch
          %101 = sbr.rel (%p99) target = $region16
        $region15: #{tpu_custom_call.1} parent=11 // pred_region
          _
        $region16: #{tpu_custom_call.1} parent=11 // pred_fallthru
          _
      $region12: #{tpu_custom_call.1} parent=5 // pred_fallthru
        _
      %p102 = scmp.lt.s32.totalorder %s11, 2
      // Predicated region
      $region17: #{tpu_custom_call.1} parent=5 // pred_check
        %p103 = pneg %p102
      $region18: #{tpu_custom_call.1} parent=5 // pred_check_branch
        %105 = sbr.rel (%p103) target = $region20
      $region19: #{tpu_custom_call.1} parent=5 // pred_region
        // Predicated region
        $region21: #{tpu_custom_call.1} parent=19 // pred_check
          %p106 = pneg %p31
        $region22: #{tpu_custom_call.1} parent=19 // pred_check_branch
          %108 = sbr.rel (%p106) target = $region24
        $region23: #{tpu_custom_call.1} parent=19 // pred_region
          %s109 = smul.u32 2, %s11
          %p110 = scmp.lt.s32.totalorder %s109, 3
          %s111 = scalar_select %p110, %s109, 3
          %s112 = smul.addr %s111, 8
          %s113 = scalar_lea.vmem %s0, %s112
          %s114 = smul.u32 2, %s11
        $region24: #{tpu_custom_call.1} parent=19 // pred_fallthru
          _
      $region20: #{tpu_custom_call.1} parent=5 // pred_fallthru
        _
      %p115 = scmp.le.s32.totalorder 1, %s11
      %p116 = scmp.lt.s32.totalorder %s11, 3
      %p117 = pnand %p115, %p116
      %p118 = pneg %p117
      // Predicated region
      $region25: #{tpu_custom_call.1} parent=5 // pred_check
        _
      $region26: #{tpu_custom_call.1} parent=5 // pred_check_branch
        %120 = sbr.rel (%p117) target = $region28
      $region27: #{tpu_custom_call.1} parent=5 // pred_region
        %s121 = ssub.s32 %s11, 1
        %s122 = smul.u32 2, %s16
        %p123 = scmp.lt.s32.totalorder %s122, 3
        %s124 = scalar_select %p123, %s122, 3
        %s125 = smul.addr %s124, 8
        %s126 = scalar_lea.vmem %s0, %s125
        %p127 = pneg %p37
        %p128 = pneg %p34
        %p129 = pneg %p58
        %p130 = pneg %p55
        %p131 = pneg %p84
        %p132 = pneg %p81
        %s133 = sand.u32 %s71, 1
        %s134 = scalar_lea.sflag [#allocation3], %s133
        %s135 = sand.u32 %s71, 1
        %s136 = smul.addr %s135, 2
        %s137 = scalar_lea.vmem [#allocation2], %s136
        %s138 = smul.u32 2, %s16
        %p139 = scmp.lt.s32.totalorder %s138, 3
        %s140 = scalar_select %p139, %s138, 3
        %s141 = smul.addr %s140, 8
        %s142 = scalar_lea.vmem %s0, %s141
        %s143 = smul.u32 2, %s16
        %v144 = vld [vmem:[%s142] sm:$0xff]
        %v145 = vld [vmem:[%s142 + $0x8] sm:$0xff]
        %vm148 = vcmask 1041408
        %v149 = vrot.slane %v144, 6
        %v150 = vrot.slane %v145, 6
        %v151 = vsel %vm148, %v149, %v150
        %v153 = vsel %vm148, 0.0, %v149
        %v154 = vld [vmem:[%s1] sm:$0xf]
        %vm155 = vcmask 1040384
        %v156 = vrot.slane %v144, 7
        %v157 = vrot.slane %v145, 7
        %v158 = vsel %vm155, %v156, %v157
        %v160 = vsel %vm155, 0.0, %v156
        %s161 = scalar_lea.vmem %s1, 4
        %v162 = vld [vmem:[%s161] sm:$0xf]
        %vm163 = vcmask 31744
        %v165 = vsel %vm163, %v160, 0
        %v167 = vsel %vm163, %v158, 0
        %vm169 = vcmask 1043456
        %v171 = vsel %vm169, %v162, 0
        %173 = vmatpush.msra.mxu0 0.0
        %174 = vmatpush.msra.mxu0 0.0
        %175 = vmatpush.msra.mxu0 0.0
        %176 = vmatpush.msra.mxu0 0.0
        %177 = vmatpush.msra.mxu0 0.0
        %178 = vmatpush.msra.mxu0 0.0
        %179 = vmatpush.msra.mxu0 0.0
        %180 = vmatpush.msra.mxu0 0.0
        %181 = vmatpush.msra.mxu0 0.0
        %182 = vmatpush.msra.mxu0 0.0
        %183 = vmatpush.msra.mxu0 0.0
        %184 = vmatpush.msra.mxu0 0.0
        %185 = vmatpush.msra.mxu0 0.0
        %186 = vmatpush.msra.mxu0 0.0
        %187 = vmatpush.msra.mxu0 0.0
        %188 = vmatpush.msra.mxu0 %v171
        %189 = vmatmul.f32.gmra.mxu0 %v165
        %v190 = vpop.f32.mrf.mxu0
        %v191 = vadd.f32 0.0, %v190
        %192 = vmatmul.f32.gmra.mxu0 %v167
        %v193 = vpop.f32.mrf.mxu0
        %v194 = vadd.f32 0.0, %v193
        %195 = vdwg.mxu0
        %v197 = vsel %vm163, %v153, 0
        %v199 = vsel %vm163, %v151, 0
        %v202 = vsel %vm169, %v154, 0
        %204 = vmatpush.msra.mxu0 0.0
        %205 = vmatpush.msra.mxu0 0.0
        %206 = vmatpush.msra.mxu0 0.0
        %207 = vmatpush.msra.mxu0 0.0
        %208 = vmatpush.msra.mxu0 0.0
        %209 = vmatpush.msra.mxu0 0.0
        %210 = vmatpush.msra.mxu0 0.0
        %211 = vmatpush.msra.mxu0 0.0
        %212 = vmatpush.msra.mxu0 0.0
        %213 = vmatpush.msra.mxu0 0.0
        %214 = vmatpush.msra.mxu0 0.0
        %215 = vmatpush.msra.mxu0 0.0
        %216 = vmatpush.msra.mxu0 0.0
        %217 = vmatpush.msra.mxu0 0.0
        %218 = vmatpush.msra.mxu0 0.0
        %219 = vmatpush.msra.mxu0 %v202
        %220 = vmatmul.f32.gmra.mxu0 %v197
        %v221 = vpop.f32.mrf.mxu0
        %v222 = vadd.f32 %v191, %v221
        %223 = vmatmul.f32.gmra.mxu0 %v199
        %v224 = vpop.f32.mrf.mxu0
        %v225 = vadd.f32 %v194, %v224
        %226 = vdwg.mxu0
        %s227 = scalar_lea.vmem %s1, 8
        %v228 = vld [vmem:[%s227] sm:$0xf]
        %v229 = vsel %vm163, %v144, 0
        %v231 = vsel %vm163, %v145, 0
        %v234 = vsel %vm169, %v228, 0
        %236 = vmatpush.msra.mxu0 0.0
        %237 = vmatpush.msra.mxu0 0.0
        %238 = vmatpush.msra.mxu0 0.0
        %239 = vmatpush.msra.mxu0 0.0
        %240 = vmatpush.msra.mxu0 0.0
        %241 = vmatpush.msra.mxu0 0.0
        %242 = vmatpush.msra.mxu0 0.0
        %243 = vmatpush.msra.mxu0 0.0
        %244 = vmatpush.msra.mxu0 0.0
        %245 = vmatpush.msra.mxu0 0.0
        %246 = vmatpush.msra.mxu0 0.0
        %247 = vmatpush.msra.mxu0 0.0
        %248 = vmatpush.msra.mxu0 0.0
        %249 = vmatpush.msra.mxu0 0.0
        %250 = vmatpush.msra.mxu0 0.0
        %251 = vmatpush.msra.mxu0 %v234
        %252 = vmatmul.f32.gmra.mxu0 %v229
        %v253 = vpop.f32.mrf.mxu0
        %v254 = vadd.f32 0.0, %v253
        %255 = vmatmul.f32.gmra.mxu0 %v231
        %v256 = vpop.f32.mrf.mxu0
        %v257 = vadd.f32 0.0, %v256
        %258 = vdwg.mxu0
        %v259 = vadd.f32 %v222, %v254
        %v260 = vadd.f32 %v225, %v257
        %vm261 = vcmask 261120
        %v262 = vsel %vm261, %v259, 0.0
        %v263 = vsel %vm261, %v260, 0.0
        %v264 = vadd.f32 %v262, %v263
        %v265 = vrot.slane %v264, 4
        %v266 = vadd.f32 %v264, %v265
        %v267 = vrot.slane %v266, 2
        %v268 = vadd.f32 %v266, %v267
        %v269 = vrot.slane %v268, 1
        %v270 = vadd.f32 %v268, %v269
        %v271 = vrcp.pop 16.0
        %v272 = vmul.f32 16.0, %v271
        %v273 = vsub.f32 1.0, %v272
        %v274 = vmul.f32 %v271, %v273
        %v275 = vadd.f32 %v271, %v274
        %vm276 = vweird.f32 %v271
        %v277 = vsel %vm276, %v271, %v275
        %v278 = vmul.f32 %v270, %v277
        %v279 = vsub.f32 %v259, %v278
        %v280 = vsub.f32 %v260, %v278
        %v281 = vmul.f32 %v279, %v279
        %v282 = vmul.f32 %v280, %v280
        %v283 = vsel %vm261, %v281, 0.0
        %v284 = vsel %vm261, %v282, 0.0
        %v285 = vadd.f32 %v283, %v284
        %v286 = vrot.slane %v285, 4
        %v287 = vadd.f32 %v285, %v286
        %v288 = vrot.slane %v287, 2
        %v289 = vadd.f32 %v287, %v288
        %v290 = vrot.slane %v289, 1
        %v291 = vadd.f32 %v289, %v290
        %v292 = vsel %vm155, %v278, %v291
        %vm293 = vcmask 254976
        %294 = vst.msk [vmem:[%s137] sm:$0x3] %vm293, %v292
        %s295 = sand.u32 %s71, 1
        %s296 = scalar_lea.sflag [#allocation3], %s295
        %s297 = sand.u32 %s71, 1
        %s298 = smul.addr %s297, 2
        %s299 = scalar_lea.vmem [#allocation2], %s298
        // Predicated region
        $region29: #{tpu_custom_call.1} parent=27 // pred_check
          %p300 = pneg %p81
        $region30: #{tpu_custom_call.1} parent=27 // pred_check_branch
          %302 = sbr.rel (%p300) target = $region32
        $region31: #{tpu_custom_call.1} parent=27 // pred_region
          %304 = vsyncadd %s296, 0
          %s305 = smul.addr %s16, 2
          %s306 = scalar_lea.hbm %s2, %s305
          %s308 = sshll.u32 %s299, 4
          %s309 = int_to_ptr.vmem [resolvable:$true] %s308
          %s310 = sshll.u32 %s306, 4
          %s311 = int_to_ptr.hbm [resolvable:$true] %s310
          %313 = dma.vmem_to_hbm [thread:$0]  %s309, 32, %s311, %s296
        $region32: #{tpu_custom_call.1} parent=27 // pred_fallthru
          _
      $region28: #{tpu_custom_call.1} parent=5 // pred_fallthru
        _
      %p314 = scmp.le.s32.totalorder 2, %s11
      // Predicated region
      $region33: #{tpu_custom_call.1} parent=5 // pred_check
        %p315 = pneg %p314
      $region34: #{tpu_custom_call.1} parent=5 // pred_check_branch
        %317 = sbr.rel (%p315) target = $region36
      $region35: #{tpu_custom_call.1} parent=5 // pred_region
        %s318 = ssub.s32 %s11, 2
        // Predicated region
        $region37: #{tpu_custom_call.1} parent=35 // pred_check
          %p319 = pneg %p87
        $region38: #{tpu_custom_call.1} parent=35 // pred_check_branch
          %321 = sbr.rel (%p319) target = $region40
        $region39: #{tpu_custom_call.1} parent=35 // pred_region
          %s322 = sand.u32 %s72, 1
          %s323 = scalar_lea.sflag [#allocation3], %s322
          %s324 = sand.u32 %s72, 1
          %s325 = smul.addr %s324, 2
          %s326 = scalar_lea.vmem [#allocation2], %s325
          %328 = dma.done %s323, 32
        $region40: #{tpu_custom_call.1} parent=35 // pred_fallthru
          _
      $region36: #{tpu_custom_call.1} parent=5 // pred_fallthru
        _
    $region6: #{tpu_custom_call.1} parent=1 // loop_footer
      %s15 = sadd.s32 1, %s11
    $region7: #{tpu_custom_call.1} parent=1 // loop_footer_branch
      %10 = sbr.rel target = $region3
    $region8: #{tpu_custom_call.1} parent=1 // loop_exit
      _
    %329 = vsyncpa [#allocation3], 1
    %s330 = scalar_lea.sflag [#allocation3], 1
    %331 = vsyncpa %s330, 1

</llo_original>
